<compile_context>
chip_gen: v7x
topology: tpu7x:2x2x1
jax: 0.10.0
libtpu: 0.0.40
codegen_flags: <defaults>
</compile_context>

<pallas_src>
import jax
import jax.numpy as jnp
from jax.experimental import pallas as pl
from jax.experimental.pallas import tpu as pltpu


def _squeeze_kernel(t_ref, x_ref, o_ref):
    # t_ref: (W, W)         column de-interleave permutation (constant block, VMEM-resident)
    # x_ref: (cb, hb, 2W)   cols [0:W] = even input rows (s1=0), cols [W:2W] = odd rows (s1=1)
    # o_ref: (4*cb, hb, Wq)
    cb, hb, W2 = x_ref.shape
    W = W2 // 2
    Wq = W // 2

    t = t_ref[...]  # read once; reused by every dot below

    for cc in range(cb):
        # Feed the MXU directly from ref slices (no full-tile load / input value slices).
        # yl[h, s2*Wq + w] == x_in[cc, 2h, 2w + s2] -> out channel 4*cc + s2
        yl = jnp.dot(x_ref[cc, :, :W], t, preferred_element_type=jnp.float32)
        yl = yl.astype(o_ref.dtype)
        o_ref[4 * cc + 0] = yl[:, :Wq]
        o_ref[4 * cc + 1] = yl[:, Wq:]
        # yr[h, s2*Wq + w] == x_in[cc, 2h + 1, 2w + s2] -> out channel 4*cc + 2 + s2
        yr = jnp.dot(x_ref[cc, :, W:], t, preferred_element_type=jnp.float32)
        yr = yr.astype(o_ref.dtype)
        o_ref[4 * cc + 2] = yr[:, :Wq]
        o_ref[4 * cc + 3] = yr[:, Wq:]


# ~2 MiB per in/out block: HBM roofline is ~saturated at this size (85%+ at 512-wide f32
# tiles) while keeping the whole working set an order of magnitude under v7x's 64 MiB VMEM.
_BLOCK_CAP = 2 * 1024 * 1024


def _pick_blocks(B, C, Hq, W, itemsize):
    """Choose (cb, hb): channel planes per grid step and Hq-rows per grid step."""
    plane_bytes = Hq * 2 * W * itemsize  # one channel plane per step (input bytes == output bytes)

    # H split only when a single channel plane exceeds the cap.  Prefer divisors of Hq that
    # are multiples of 8 (sublane-aligned blocks); if none exists, keep the full plane
    # (still correct — the VMEM limit below is raised to cover it).
    hb = Hq
    if plane_bytes > _BLOCK_CAP:
        best = None
        for d in range(8, Hq + 1, 8):
            if Hq % d == 0 and d * 2 * W * itemsize <= _BLOCK_CAP:
                best = d
        if best is not None:
            hb = best

    # Channel batching (only when the plane is small): largest divisor of C, capped at 8 to
    # bound the in-kernel unroll, whose block stays under the cap.
    cb = 1
    if hb == Hq:
        for d in range(2, min(C, 8) + 1):
            if C % d == 0 and d * plane_bytes <= _BLOCK_CAP:
                cb = d

    # Keep >= 8 grid steps: v7x shards the parallel grid across 2 TensorCores, and more,
    # smaller steps keep the input/output DMA prologue/epilogue hidden and balanced.
    while cb > 1 and B * (C // cb) * (Hq // hb) < 8:
        cb -= 1
        while C % cb != 0:
            cb -= 1
    return cb, hb


def squeeze(x):
    """RealNVP squeeze: (B, C, H, W) -> (B, 4C, H//2, W//2), NCHW layout."""
    B, C, H, W = x.shape
    assert H % 2 == 0 and W % 2 == 0, "H and W must be even"
    # The de-interleave runs through the MXU (f32 accumulate); only float activations are
    # exact (and v7x has no integer MXU at all).
    assert jnp.issubdtype(x.dtype, jnp.floating), "squeeze kernel supports float dtypes only"

    Hq, Wq = H // 2, W // 2
    itemsize = jnp.dtype(x.dtype).itemsize

    cb, hb = _pick_blocks(B, C, Hq, W, itemsize)
    G = C // cb
    nH = Hq // hb
    W2 = 2 * W

    # Free (contiguous) reshape: x2[b, c, h, s1*W + w] == x[b, c, 2h + s1, w].
    x2 = x.reshape(B, C, Hq, W2)

    # Column de-interleave permutation, hoisted out of the kernel: T[2w + s2, s2*Wq + w] = 1.
    jj = jax.lax.broadcasted_iota(jnp.int32, (W, W), 0)
    nn = jax.lax.broadcasted_iota(jnp.int32, (W, W), 1)
    t = (jj == 2 * (nn % Wq) + nn // Wq).astype(x.dtype)

    # Temp-inclusive VMEM accounting (review item): resident T (2 pipeline buffers even with
    # a constant index_map), double-buffered in/out blocks, f32 matmul temporaries, and
    # possible relayout copies of the two dot operands.
    block_io = cb * hb * W2 * itemsize  # input block bytes == output block bytes
    vmem_need = (
        2 * W * W * itemsize          # T (double-buffered by the default pipeline)
        + 2 * block_io + 2 * block_io # double-buffered input + output blocks
        + 2 * hb * W * 4              # yl / yr f32 matmul results
        + 2 * hb * W * itemsize       # dot-operand relayout copies (misaligned shapes)
    )
    vmem_limit = min(max(vmem_need + (4 << 20), 16 << 20), 48 << 20)

    return pl.pallas_call(
        _squeeze_kernel,
        out_shape=jax.ShapeDtypeStruct((B, 4 * C, Hq, Wq), x.dtype),
        grid=(B, G, nH),
        in_specs=[
            # Constant block index -> fetched once, stays VMEM-resident across the grid.
            pl.BlockSpec((W, W), lambda b, g, hi: (0, 0)),
            # One (cb, hb, 2W) slab per (batch, channel-group, row-block).
            pl.BlockSpec((None, cb, hb, W2), lambda b, g, hi: (b, g, hi, 0)),
        ],
        out_specs=pl.BlockSpec((None, 4 * cb, hb, Wq), lambda b, g, hi: (b, g, hi, 0)),
        compiler_params=pltpu.CompilerParams(
            dimension_semantics=("parallel", "parallel", "parallel"),
            vmem_limit_bytes=vmem_limit,
        ),
    )(t, x2)


def _squeeze_reference(x):
    B, C, H, W = x.shape
    y = x.reshape(B, C, H // 2, 2, W // 2, 2)
    y = jnp.transpose(y, (0, 1, 3, 5, 2, 4))
    return y.reshape(B, 4 * C, H // 2, W // 2)


if __name__ == "__main__":
    key = jax.random.PRNGKey(0)
    x = jax.random.normal(key, (2, 4, 16, 16), dtype=jnp.float32)

    y = squeeze(x)
    y = jax.block_until_ready(y)

    ref = _squeeze_reference(x)
    assert y.shape == (2, 16, 8, 8), y.shape
    assert y.dtype == x.dtype, y.dtype
    assert jnp.allclose(y, ref), "Pallas squeeze does not match reference"

    print("KERNEL_OK")
</pallas_src>

<mosaic_0001>
module attributes {stable_mosaic.version = 11 : i64} {
  func.func @_squeeze_kernel(%arg0: i32, %arg1: i32, %arg2: i32, %arg3: memref<16x16xf32, #tpu.memory_space<vmem>>, %arg4: memref<1x1x8x32xf32, #tpu.memory_space<vmem>>, %arg5: memref<1x4x8x8xf32, #tpu.memory_space<vmem>>) attributes {dimension_semantics = [#tpu.dimension_semantics<parallel>, #tpu.dimension_semantics<parallel>, #tpu.dimension_semantics<parallel>], iteration_bounds = array<i64: 2, 4, 1>, scalar_prefetch = 0 : i64, scratch_operands = 0 : i64, tpu.core_type = #tpu.core_type<tc>, window_params = [{pipeline_mode = #tpu.pipeline_mode<synchronous>, transform_indices = @transform_0, window_bounds = array<i64: 16, 16>}, {transform_indices = @transform_1, window_bounds = array<i64: 1, 1, 8, 32>}, {transform_indices = @transform_2, window_bounds = array<i64: 1, 4, 8, 8>}]} {
    %c0 = arith.constant 0 : index
    %c0_0 = arith.constant 0 : index
    %0 = vector.load %arg3[%c0, %c0_0] : memref<16x16xf32, #tpu.memory_space<vmem>>, vector<16x16xf32>
    %c0_1 = arith.constant 0 : index
    %c0_2 = arith.constant 0 : index
    %c0_3 = arith.constant 0 : index
    %c0_4 = arith.constant 0 : index
    %1 = vector.load %arg4[%c0_1, %c0_2, %c0_3, %c0_4] : memref<1x1x8x32xf32, #tpu.memory_space<vmem>>, vector<1x1x8x16xf32>
    %2 = vector.shape_cast %1 : vector<1x1x8x16xf32> to vector<8x16xf32>
    %cst = arith.constant dense<0.000000e+00> : vector<8x16xf32>
    %3 = tpu.matmul %2, %0, %cst {dimension_numbers = #tpu.dot_dimension_numbers<[1], [0], [0], [1], [0, 0, 1, 1], [], []>} : vector<8x16xf32>, vector<16x16xf32>, vector<8x16xf32> -> vector<8x16xf32>
    %4 = vector.extract_strided_slice %3 {offsets = [0, 0], sizes = [8, 8], strides = [1, 1]} : vector<8x16xf32> to vector<8x8xf32>
    %c0_5 = arith.constant 0 : index
    %c0_6 = arith.constant 0 : index
    %c0_7 = arith.constant 0 : index
    %c0_8 = arith.constant 0 : index
    %5 = vector.load %arg5[%c0_5, %c0_6, %c0_7, %c0_8] : memref<1x4x8x8xf32, #tpu.memory_space<vmem>>, vector<1x1x8x8xf32>
    %6 = vector.shape_cast %5 : vector<1x1x8x8xf32> to vector<8x8xf32>
    %7 = vector.shape_cast %4 : vector<8x8xf32> to vector<1x1x8x8xf32>
    tpu.vector_store %arg5[%c0_5, %c0_6, %c0_7, %c0_8], %7 {strides = array<i32>} : memref<1x4x8x8xf32, #tpu.memory_space<vmem>>, vector<1x1x8x8xf32>,
    %8 = vector.extract_strided_slice %3 {offsets = [0, 8], sizes = [8, 8], strides = [1, 1]} : vector<8x16xf32> to vector<8x8xf32>
    %c0_9 = arith.constant 0 : index
    %c1 = arith.constant 1 : index
    %c0_10 = arith.constant 0 : index
    %c0_11 = arith.constant 0 : index
    %9 = vector.load %arg5[%c0_9, %c1, %c0_10, %c0_11] : memref<1x4x8x8xf32, #tpu.memory_space<vmem>>, vector<1x1x8x8xf32>
    %10 = vector.shape_cast %9 : vector<1x1x8x8xf32> to vector<8x8xf32>
    %11 = vector.shape_cast %8 : vector<8x8xf32> to vector<1x1x8x8xf32>
    tpu.vector_store %arg5[%c0_9, %c1, %c0_10, %c0_11], %11 {strides = array<i32>} : memref<1x4x8x8xf32, #tpu.memory_space<vmem>>, vector<1x1x8x8xf32>,
    %c0_12 = arith.constant 0 : index
    %c0_13 = arith.constant 0 : index
    %c0_14 = arith.constant 0 : index
    %c16 = arith.constant 16 : index
    %12 = vector.load %arg4[%c0_12, %c0_13, %c0_14, %c16] : memref<1x1x8x32xf32, #tpu.memory_space<vmem>>, vector<1x1x8x16xf32>
    %13 = vector.shape_cast %12 : vector<1x1x8x16xf32> to vector<8x16xf32>
    %cst_15 = arith.constant dense<0.000000e+00> : vector<8x16xf32>
    %14 = tpu.matmul %13, %0, %cst_15 {dimension_numbers = #tpu.dot_dimension_numbers<[1], [0], [0], [1], [0, 0, 1, 1], [], []>} : vector<8x16xf32>, vector<16x16xf32>, vector<8x16xf32> -> vector<8x16xf32>
    %15 = vector.extract_strided_slice %14 {offsets = [0, 0], sizes = [8, 8], strides = [1, 1]} : vector<8x16xf32> to vector<8x8xf32>
    %c0_16 = arith.constant 0 : index
    %c2 = arith.constant 2 : index
    %c0_17 = arith.constant 0 : index
    %c0_18 = arith.constant 0 : index
    %16 = vector.load %arg5[%c0_16, %c2, %c0_17, %c0_18] : memref<1x4x8x8xf32, #tpu.memory_space<vmem>>, vector<1x1x8x8xf32>
    %17 = vector.shape_cast %16 : vector<1x1x8x8xf32> to vector<8x8xf32>
    %18 = vector.shape_cast %15 : vector<8x8xf32> to vector<1x1x8x8xf32>
    tpu.vector_store %arg5[%c0_16, %c2, %c0_17, %c0_18], %18 {strides = array<i32>} : memref<1x4x8x8xf32, #tpu.memory_space<vmem>>, vector<1x1x8x8xf32>,
    %19 = vector.extract_strided_slice %14 {offsets = [0, 8], sizes = [8, 8], strides = [1, 1]} : vector<8x16xf32> to vector<8x8xf32>
    %c0_19 = arith.constant 0 : index
    %c3 = arith.constant 3 : index
    %c0_20 = arith.constant 0 : index
    %c0_21 = arith.constant 0 : index
    %20 = vector.load %arg5[%c0_19, %c3, %c0_20, %c0_21] : memref<1x4x8x8xf32, #tpu.memory_space<vmem>>, vector<1x1x8x8xf32>
    %21 = vector.shape_cast %20 : vector<1x1x8x8xf32> to vector<8x8xf32>
    %22 = vector.shape_cast %19 : vector<8x8xf32> to vector<1x1x8x8xf32>
    tpu.vector_store %arg5[%c0_19, %c3, %c0_20, %c0_21], %22 {strides = array<i32>} : memref<1x4x8x8xf32, #tpu.memory_space<vmem>>, vector<1x1x8x8xf32>,
    return
  }
  func.func @transform_0(%arg0: i32, %arg1: i32, %arg2: i32) -> (i32, i32) {
    %c0_i32 = arith.constant 0 : i32
    %c0_i32_0 = arith.constant 0 : i32
    %c0_i32_1 = arith.constant 0 : i32
    return %c0_i32, %c0_i32_0 : i32, i32
  }
  func.func @transform_1(%arg0: i32, %arg1: i32, %arg2: i32) -> (i32, i32, i32, i32) {
    %c0_i32 = arith.constant 0 : i32
    %c0_i32_0 = arith.constant 0 : i32
    return %arg0, %arg1, %arg2, %c0_i32 : i32, i32, i32, i32
  }
  func.func @transform_2(%arg0: i32, %arg1: i32, %arg2: i32) -> (i32, i32, i32, i32) {
    %c0_i32 = arith.constant 0 : i32
    %c0_i32_0 = arith.constant 0 : i32
    return %arg0, %arg1, %arg2, %c0_i32 : i32, i32, i32, i32
  }
}

</mosaic_0001>

<llo_original>
// kernel: tpu_custom_call.1
$region0: #{tpu_custom_call.1}
  #allocation0 [shape = 'u32[]', space=smem, size = 0x4, offset = 0x4, fixed_abs, tag = 'smem constant byte address 0x4 - core index']
  #allocation1 [shape = 'u32[144,128]{1,0:T(1,128)}', space=vmem, size = 0x12000, scoped, tag = 'internal scratch']
  %s0 = inlined_call_operand.hbm [shape: f32[16,16], index: 0, kind: input, shape index: {}]
  %s1 = inlined_call_operand.hbm [shape: f32[2,4,8,32], index: 1, kind: input, shape index: {}]
  %s2 = inlined_call_operand.vmem [shape: f32[2,16,8,8], index: 2, kind: output, shape index: {}]
  %s3 = sld [smem:[#allocation0]]
  $region49: #{tpu_custom_call.1} parent=0
    _
  %s5 = ssub.s32 1, %s3
  %s6 = scalar_select 0, %s5, %s3
  $region1: #{tpu_custom_call.1} parent=0
    #allocation2 [shape = 'u8[8192]{0}', space=vmem, size = 0x2000, scoped, tag = 'input window, operand 0, single buffered']
    #allocation3 [shape = 's32[2]{0}', space=sflag, size = 0x8, scoped, tag = 'scoped memory for tpu_custom_call.1']
    #allocation4 [shape = 'u8[8192]{0}', space=vmem, size = 0x2000, scoped, tag = 'input window, operand 1']
    #allocation5 [shape = 's32[2]{0}', space=sflag, size = 0x8, scoped, tag = 'scoped memory for tpu_custom_call.1']
    %7 = vsyncpa [#allocation3], 0
    %8 = vsyncpa [#allocation5], 0
    %s9 = scalar_lea.sflag [#allocation5], 1
    %10 = vsyncpa %s9, 0
    loop: start=0, step=1, limit=10
    $region2: #{tpu_custom_call.1} parent=1 // loop_pre_header
      _
    $region3: #{tpu_custom_call.1} parent=1 // loop_header
      %s12 = sphi 0, %s16
      %p13 = scmp.ge.s32.totalorder %s12, 10
      %s19 = sphi 0, %s38
      %s20 = sphi 0, %s34
      %s21 = sphi 0, %s30
      %s22 = sphi 0, %s19
      %s23 = sphi 0, %s20
      %s24 = sphi 0, %s21
      %s25 = sphi 0, %s22
      %s26 = sphi 0, %s23
      %s27 = sphi 0, %s24
      %s39 = sphi 0, %s39
      %s41 = sphi 0, %s39
      %s42 = sphi 0, %s41
      %s56 = sphi 0, %s42
      %s66 = sphi 0, %s68
      %s69 = sphi 0, %s66
      %s70 = sphi 0, %s69
      %s86 = sphi 0, %s70
      %s96 = sphi 0, %s98
      %s99 = sphi 0, %s96
      %s100 = sphi 0, %s99
      %s116 = sphi 0, %s100
    $region4: #{tpu_custom_call.1} parent=1 // loop_header_branch
      %15 = sbr.rel (%p13) target = $region8
    $region5: #{tpu_custom_call.1} parent=1 // loop_body
      %s17 = ssub.s32 %s12, 1
      %s18 = ssub.s32 %s12, 2
      %s28 = sadd.s32 1, %s21
      %p29 = scmp.ge.s32.totalorder %s28, 1
      %s30 = scalar_select %p29, 0, %s28
      %s31 = sadd.s32 1, %s20
      %s32 = scalar_select %p29, %s31, %s20
      %p33 = scmp.ge.s32.totalorder %s32, 4
      %s34 = scalar_select %p33, 0, %s32
      %s35 = sadd.s32 1, %s19
      %s36 = scalar_select %p33, %s35, %s19
      %p37 = scmp.ge.s32.totalorder %s36, 2
      %s38 = scalar_select %p37, 0, %s36
      %s40 = sadd.s32 %s39, 1
      %p43 = scmp.eq.s32.totalorder %s12, 7
      %p44 = scmp.ne.s32.totalorder %s39, %s41
      %p45 = scmp.eq.s32.totalorder %s12, 0
      %p46 = por %p44, %p45
      %p47 = scmp.ne.s32.totalorder %s39, %s41
      %p48 = scmp.eq.s32.totalorder %s17, 7
      %p49 = por %p47, %p48
      %p50 = scmp.ne.s32.totalorder %s41, %s42
      %p51 = scmp.eq.s32.totalorder %s17, 0
      %p52 = por %p50, %p51
      %p53 = scmp.ne.s32.totalorder %s41, %s42
      %p54 = scmp.eq.s32.totalorder %s18, 7
      %p55 = por %p53, %p54
      %p57 = scmp.ne.s32.totalorder %s42, %s56
      %p58 = scmp.eq.s32.totalorder %s18, 0
      %p59 = por %p57, %p58
      %s60 = ssub.s32 %s19, %s38
      %s61 = ssub.s32 %s20, %s34
      %s62 = sor.u32 %s60, %s61
      %s63 = ssub.s32 %s21, %s30
      %s64 = sor.u32 %s62, %s63
      %p65 = scmp.eq.s32.totalorder %s64, 0
      %s67 = sadd.s32 %s66, 1
      %s68 = scalar_select %p65, %s66, %s67
      %p71 = pneg %p65
      %p72 = scmp.eq.s32.totalorder %s12, 7
      %p73 = por %p71, %p72
      %p74 = scmp.ne.s32.totalorder %s66, %s69
      %p75 = scmp.eq.s32.totalorder %s12, 0
      %p76 = por %p74, %p75
      %p77 = scmp.ne.s32.totalorder %s66, %s69
      %p78 = scmp.eq.s32.totalorder %s17, 7
      %p79 = por %p77, %p78
      %p80 = scmp.ne.s32.totalorder %s69, %s70
      %p81 = scmp.eq.s32.totalorder %s17, 0
      %p82 = por %p80, %p81
      %p83 = scmp.ne.s32.totalorder %s69, %s70
      %p84 = scmp.eq.s32.totalorder %s18, 7
      %p85 = por %p83, %p84
      %p87 = scmp.ne.s32.totalorder %s70, %s86
      %p88 = scmp.eq.s32.totalorder %s18, 0
      %p89 = por %p87, %p88
      %s90 = ssub.s32 %s19, %s38
      %s91 = ssub.s32 %s20, %s34
      %s92 = sor.u32 %s90, %s91
      %s93 = ssub.s32 %s21, %s30
      %s94 = sor.u32 %s92, %s93
      %p95 = scmp.eq.s32.totalorder %s94, 0
      %s97 = sadd.s32 %s96, 1
      %s98 = scalar_select %p95, %s96, %s97
      %p101 = pneg %p95
      %p102 = scmp.eq.s32.totalorder %s12, 7
      %p103 = por %p101, %p102
      %p104 = scmp.ne.s32.totalorder %s96, %s99
      %p105 = scmp.eq.s32.totalorder %s12, 0
      %p106 = por %p104, %p105
      %p107 = scmp.ne.s32.totalorder %s96, %s99
      %p108 = scmp.eq.s32.totalorder %s17, 7
      %p109 = por %p107, %p108
      %p110 = scmp.ne.s32.totalorder %s99, %s100
      %p111 = scmp.eq.s32.totalorder %s17, 0
      %p112 = por %p110, %p111
      %p113 = scmp.ne.s32.totalorder %s99, %s100
      %p114 = scmp.eq.s32.totalorder %s18, 7
      %p115 = por %p113, %p114
      %p117 = scmp.ne.s32.totalorder %s100, %s116
      %p118 = scmp.eq.s32.totalorder %s18, 0
      %p119 = por %p117, %p118
      %p120 = scmp.le.s32.totalorder 1, %s12
      %p121 = scmp.lt.s32.totalorder %s12, 9
      %p122 = pnand %p120, %p121
      %p123 = pneg %p122
      // Predicated region
      $region9: #{tpu_custom_call.1} parent=5 // pred_check
        _
      $region10: #{tpu_custom_call.1} parent=5 // pred_check_branch
        %125 = sbr.rel (%p122) target = $region12
      $region11: #{tpu_custom_call.1} parent=5 // pred_region
        %s126 = ssub.s32 %s12, 1
        // Predicated region
        $region13: #{tpu_custom_call.1} parent=11 // pred_check
          %p127 = pneg %p52
        $region14: #{tpu_custom_call.1} parent=11 // pred_check_branch
          %129 = sbr.rel (%p127) target = $region16
        $region15: #{tpu_custom_call.1} parent=11 // pred_region
          %s131 = ssub.s32 256, 256
          %132 = vsyncadd [#allocation3], %s131
          %s133 = sshll.u32 [#allocation2], 4
          %s134 = int_to_ptr.vmem [resolvable:$true] %s133
          %139 = dma.hbm_to_vmem [thread:$0]  %s0, 256, %s134, [#allocation3], 128, 128, 8
        $region16: #{tpu_custom_call.1} parent=11 // pred_fallthru
          _
      $region12: #{tpu_custom_call.1} parent=5 // pred_fallthru
        _
      %p140 = scmp.lt.s32.totalorder %s12, 8
      // Predicated region
      $region17: #{tpu_custom_call.1} parent=5 // pred_check
        %p141 = pneg %p140
      $region18: #{tpu_custom_call.1} parent=5 // pred_check_branch
        %143 = sbr.rel (%p141) target = $region20
      $region19: #{tpu_custom_call.1} parent=5 // pred_region
        // Predicated region
        $region21: #{tpu_custom_call.1} parent=19 // pred_check
          %p144 = pneg %p76
        $region22: #{tpu_custom_call.1} parent=19 // pred_check_branch
          %146 = sbr.rel (%p144) target = $region24
        $region23: #{tpu_custom_call.1} parent=19 // pred_region
          %s147 = sand.u32 %s66, 1
          %s148 = scalar_lea.sflag [#allocation5], %s147
          %s149 = sand.u32 %s66, 1
          %s150 = smul.addr %s149, 8
          %s151 = scalar_lea.vmem [#allocation4], %s150
          %s153 = ssub.s32 128, 128
          %154 = vsyncadd %s148, %s153
          %s155 = sadd.s32 %s21, %s20
          %s156 = smul.addr %s19, 4
          %s157 = sadd.s32 %s155, %s156
          %s158 = smul.addr %s157, 128
          %s159 = scalar_lea.hbm %s1, %s158
          %s161 = sshll.u32 %s151, 4
          %s162 = int_to_ptr.vmem [resolvable:$true] %s161
          %164 = dma.hbm_to_vmem [thread:$0]  %s159, 128, %s162, %s148
        $region24: #{tpu_custom_call.1} parent=19 // pred_fallthru
          _
      $region20: #{tpu_custom_call.1} parent=5 // pred_fallthru
        _
      %p165 = scmp.le.s32.totalorder 1, %s12
      %p166 = scmp.lt.s32.totalorder %s12, 9
      %p167 = pnand %p165, %p166
      %p168 = pneg %p167
      // Predicated region
      $region25: #{tpu_custom_call.1} parent=5 // pred_check
        _
      $region26: #{tpu_custom_call.1} parent=5 // pred_check_branch
        %170 = sbr.rel (%p167) target = $region28
      $region27: #{tpu_custom_call.1} parent=5 // pred_region
        %s171 = ssub.s32 %s12, 1
        // Predicated region
        $region29: #{tpu_custom_call.1} parent=27 // pred_check
          %p172 = pneg %p52
        $region30: #{tpu_custom_call.1} parent=27 // pred_check_branch
          %174 = sbr.rel (%p172) target = $region32
        $region31: #{tpu_custom_call.1} parent=27 // pred_region
          %175 = dma.done [#allocation3], 256
        $region32: #{tpu_custom_call.1} parent=27 // pred_fallthru
          _
        %s176 = sand.u32 %s69, 1
        %s177 = scalar_lea.sflag [#allocation5], %s176
        %s178 = sand.u32 %s69, 1
        %s179 = smul.addr %s178, 8
        %s180 = scalar_lea.vmem [#allocation4], %s179
        // Predicated region
        $region33: #{tpu_custom_call.1} parent=27 // pred_check
          %p181 = pneg %p82
        $region34: #{tpu_custom_call.1} parent=27 // pred_check_branch
          %183 = sbr.rel (%p181) target = $region36
        $region35: #{tpu_custom_call.1} parent=27 // pred_region
          %184 = dma.done %s177, 128
        $region36: #{tpu_custom_call.1} parent=27 // pred_fallthru
          _
        %p185 = pneg %p52
        %p186 = pneg %p49
        %s187 = sand.u32 %s69, 1
        %s188 = scalar_lea.sflag [#allocation5], %s187
        %s189 = sand.u32 %s69, 1
        %s190 = smul.addr %s189, 8
        %s191 = scalar_lea.vmem [#allocation4], %s190
        %p192 = pneg %p82
        %p193 = pneg %p79
        %p194 = pneg %p112
        %p195 = pneg %p109
        %s196 = smul.u32 4, %s23
        %p197 = scmp.lt.s32.totalorder %s22, 1
        %s198 = scalar_select %p197, %s22, 1
        %p199 = scmp.lt.s32.totalorder %s196, 15
        %s200 = scalar_select %p199, %s196, 15
        %p201 = scmp.lt.s32.totalorder %s24, 0
        %s202 = scalar_select %p201, %s24, 0
        %s203 = sadd.s32 %s202, %s200
        %s204 = smul.addr %s198, 16
        %s205 = sadd.s32 %s203, %s204
        %s206 = smul.addr %s205, 8
        %s207 = scalar_lea.vmem %s2, %s206
        %s208 = smul.u32 4, %s23
        %p209 = scmp.lt.s32.totalorder %s22, 1
        %s210 = scalar_select %p209, %s22, 1
        %p211 = scmp.lt.s32.totalorder %s208, 15
        %s212 = scalar_select %p211, %s208, 15
        %p213 = scmp.lt.s32.totalorder %s24, 0
        %s214 = scalar_select %p213, %s24, 0
        %s215 = sadd.s32 %s214, %s212
        %s216 = smul.addr %s210, 16
        %s217 = sadd.s32 %s215, %s216
        %s218 = smul.addr %s217, 8
        %s219 = scalar_lea.vmem %s2, %s218
        %s220 = smul.u32 4, %s23
        %v221 = vld [vmem:[#allocation2] sm:$0xff]
        %v222 = vld [vmem:[#allocation2 + $0x8] sm:$0xff]
        %v223 = vld [vmem:[%s180] sm:$0xff]
        %vm224 = vcmask 130048
        %v226 = vsel %vm224, %v223, 0
        %228 = vmatprep.subr.mxu0 0.0
        %229 = vmatpush1.msra.mxu0 %v221
        %230 = vmatprep.subr.mxu0 0.0
        %231 = vmatpush1.msra.mxu0 %v222
        %232 = vmatprep.subr.mxu0 0.0
        %233 = vmatpush1.msra.mxu0 0.0
        %234 = vmatprep.subr.mxu0 0.0
        %235 = vmatpush1.msra.mxu0 0.0
        %236 = vmatprep.subr.mxu0 0.0
        %237 = vmatpush1.msra.mxu0 0.0
        %238 = vmatprep.subr.mxu0 0.0
        %239 = vmatpush1.msra.mxu0 0.0
        %240 = vmatprep.subr.mxu0 0.0
        %241 = vmatpush1.msra.mxu0 0.0
        %242 = vmatprep.subr.mxu0 0.0
        %243 = vmatpush1.msra.mxu0 0.0
        %244 = vmatprep.subr.mxu0 0.0
        %245 = vmatpush1.msra.mxu0 0.0
        %246 = vmatprep.subr.mxu0 0.0
        %247 = vmatpush1.msra.mxu0 0.0
        %248 = vmatprep.subr.mxu0 0.0
        %249 = vmatpush1.msra.mxu0 0.0
        %250 = vmatprep.subr.mxu0 0.0
        %251 = vmatpush1.msra.mxu0 0.0
        %252 = vmatprep.subr.mxu0 0.0
        %253 = vmatpush1.msra.mxu0 0.0
        %254 = vmatprep.subr.mxu0 0.0
        %255 = vmatpush1.msra.mxu0 0.0
        %256 = vmatprep.subr.mxu0 0.0
        %257 = vmatpush1.msra.mxu0 0.0
        %258 = vmatprep.subr.mxu0 0.0
        %259 = vmatpush1.msra.mxu0 0.0
        %260 = vmatprep.subr.mxu0 0.0
        %261 = vmatpush1.msra.mxu0 0.0
        %262 = vmatprep.subr.mxu0 0.0
        %263 = vmatpush1.msra.mxu0 0.0
        %264 = vmatprep.subr.mxu0 0.0
        %265 = vmatpush1.msra.mxu0 0.0
        %266 = vmatprep.subr.mxu0 0.0
        %267 = vmatpush1.msra.mxu0 0.0
        %268 = vmatprep.subr.mxu0 0.0
        %269 = vmatpush1.msra.mxu0 0.0
        %270 = vmatprep.subr.mxu0 0.0
        %271 = vmatpush1.msra.mxu0 0.0
        %272 = vmatprep.subr.mxu0 0.0
        %273 = vmatpush1.msra.mxu0 0.0
        %274 = vmatprep.subr.mxu0 0.0
        %275 = vmatpush1.msra.mxu0 0.0
        %276 = vmatprep.subr.mxu0 0.0
        %277 = vmatpush1.msra.mxu0 0.0
        %278 = vmatprep.subr.mxu0 0.0
        %279 = vmatpush1.msra.mxu0 0.0
        %280 = vmatprep.subr.mxu0 0.0
        %281 = vmatpush1.msra.mxu0 0.0
        %282 = vmatprep.subr.mxu0 0.0
        %283 = vmatpush1.msra.mxu0 0.0
        %284 = vmatprep.subr.mxu0 0.0
        %285 = vmatpush1.msra.mxu0 0.0
        %286 = vmatprep.subr.mxu0 0.0
        %287 = vmatpush1.msra.mxu0 0.0
        %288 = vmatprep.subr.mxu0 0.0
        %289 = vmatpush1.msra.mxu0 0.0
        %290 = vmatprep.subr.mxu0 0.0
        %291 = vmatpush1.msra.mxu0 0.0
        %292 = vmatprep.mubr.f32.mxu0 0.0
        %293 = vmatmul.mubr.f32.gmra.mrb[0].mxu0 %v226
        %v294 = vpop.f32.mrb[0].mxu0
        %v295 = vadd.f32 0.0, %v294
        %v296 = vpop.f32.mrb[0].mxu0
        %297 = vdwg.mxu0
        %vm298 = vcmask 64512
        %299 = vst.msk [vmem:[%s219] sm:$0xff] %vm298, %v295
        %301 = vrot.lane.b32.xlu0 %v295, 120
        %v302 = vpop.permute.xlu0 %301
        %s304 = scalar_lea.vmem %s219, 8
        %305 = vst.msk [vmem:[%s304] sm:$0xff] %vm298, %v302
        %v306 = vld [vmem:[%s180] sm:$0xff]
        %308 = vrot.lane.b32.xlu0 %v306, 112
        %v309 = vpop.permute.xlu0 %308
        %v310 = vsel %vm224, %v309, 0
        %312 = vmatprep.subr.mxu0 0.0
        %313 = vmatpush1.msra.mxu0 %v221
        %314 = vmatprep.subr.mxu0 0.0
        %315 = vmatpush1.msra.mxu0 %v222
        %316 = vmatprep.subr.mxu0 0.0
        %317 = vmatpush1.msra.mxu0 0.0
        %318 = vmatprep.subr.mxu0 0.0
        %319 = vmatpush1.msra.mxu0 0.0
        %320 = vmatprep.subr.mxu0 0.0
        %321 = vmatpush1.msra.mxu0 0.0
        %322 = vmatprep.subr.mxu0 0.0
        %323 = vmatpush1.msra.mxu0 0.0
        %324 = vmatprep.subr.mxu0 0.0
        %325 = vmatpush1.msra.mxu0 0.0
        %326 = vmatprep.subr.mxu0 0.0
        %327 = vmatpush1.msra.mxu0 0.0
        %328 = vmatprep.subr.mxu0 0.0
        %329 = vmatpush1.msra.mxu0 0.0
        %330 = vmatprep.subr.mxu0 0.0
        %331 = vmatpush1.msra.mxu0 0.0
        %332 = vmatprep.subr.mxu0 0.0
        %333 = vmatpush1.msra.mxu0 0.0
        %334 = vmatprep.subr.mxu0 0.0
        %335 = vmatpush1.msra.mxu0 0.0
        %336 = vmatprep.subr.mxu0 0.0
        %337 = vmatpush1.msra.mxu0 0.0
        %338 = vmatprep.subr.mxu0 0.0
        %339 = vmatpush1.msra.mxu0 0.0
        %340 = vmatprep.subr.mxu0 0.0
        %341 = vmatpush1.msra.mxu0 0.0
        %342 = vmatprep.subr.mxu0 0.0
        %343 = vmatpush1.msra.mxu0 0.0
        %344 = vmatprep.subr.mxu0 0.0
        %345 = vmatpush1.msra.mxu0 0.0
        %346 = vmatprep.subr.mxu0 0.0
        %347 = vmatpush1.msra.mxu0 0.0
        %348 = vmatprep.subr.mxu0 0.0
        %349 = vmatpush1.msra.mxu0 0.0
        %350 = vmatprep.subr.mxu0 0.0
        %351 = vmatpush1.msra.mxu0 0.0
        %352 = vmatprep.subr.mxu0 0.0
        %353 = vmatpush1.msra.mxu0 0.0
        %354 = vmatprep.subr.mxu0 0.0
        %355 = vmatpush1.msra.mxu0 0.0
        %356 = vmatprep.subr.mxu0 0.0
        %357 = vmatpush1.msra.mxu0 0.0
        %358 = vmatprep.subr.mxu0 0.0
        %359 = vmatpush1.msra.mxu0 0.0
        %360 = vmatprep.subr.mxu0 0.0
        %361 = vmatpush1.msra.mxu0 0.0
        %362 = vmatprep.subr.mxu0 0.0
        %363 = vmatpush1.msra.mxu0 0.0
        %364 = vmatprep.subr.mxu0 0.0
        %365 = vmatpush1.msra.mxu0 0.0
        %366 = vmatprep.subr.mxu0 0.0
        %367 = vmatpush1.msra.mxu0 0.0
        %368 = vmatprep.subr.mxu0 0.0
        %369 = vmatpush1.msra.mxu0 0.0
        %370 = vmatprep.subr.mxu0 0.0
        %371 = vmatpush1.msra.mxu0 0.0
        %372 = vmatprep.subr.mxu0 0.0
        %373 = vmatpush1.msra.mxu0 0.0
        %374 = vmatprep.subr.mxu0 0.0
        %375 = vmatpush1.msra.mxu0 0.0
        %376 = vmatprep.mubr.f32.mxu0 0.0
        %377 = vmatmul.mubr.f32.gmra.mrb[0].mxu0 %v310
        %v378 = vpop.f32.mrb[0].mxu0
        %v379 = vadd.f32 0.0, %v378
        %v380 = vpop.f32.mrb[0].mxu0
        %381 = vdwg.mxu0
        %s382 = scalar_lea.vmem %s219, 16
        %383 = vst.msk [vmem:[%s382] sm:$0xff] %vm298, %v379
        %385 = vrot.lane.b32.xlu0 %v379, 120
        %v386 = vpop.permute.xlu0 %385
        %s388 = scalar_lea.vmem %s219, 24
        %389 = vst.msk [vmem:[%s388] sm:$0xff] %vm298, %v386
        %s390 = smul.u32 4, %s23
        %p391 = scmp.lt.s32.totalorder %s22, 1
        %s392 = scalar_select %p391, %s22, 1
        %p393 = scmp.lt.s32.totalorder %s390, 15
        %s394 = scalar_select %p393, %s390, 15
        %p395 = scmp.lt.s32.totalorder %s24, 0
        %s396 = scalar_select %p395, %s24, 0
        %s397 = sadd.s32 %s396, %s394
        %s398 = smul.addr %s392, 16
        %s399 = sadd.s32 %s397, %s398
        %s400 = smul.addr %s399, 8
        %s401 = scalar_lea.vmem %s2, %s400
        // Predicated region
        $region37: #{tpu_custom_call.1} parent=27 // pred_check
          %p402 = pneg %p109
        $region38: #{tpu_custom_call.1} parent=27 // pred_check_branch
          %404 = sbr.rel (%p402) target = $region40
        $region39: #{tpu_custom_call.1} parent=27 // pred_region
          %s405 = smul.u32 4, %s23
        $region40: #{tpu_custom_call.1} parent=27 // pred_fallthru
          _
      $region28: #{tpu_custom_call.1} parent=5 // pred_fallthru
        _
      %p406 = scmp.le.s32.totalorder 2, %s12
      // Predicated region
      $region41: #{tpu_custom_call.1} parent=5 // pred_check
        %p407 = pneg %p406
      $region42: #{tpu_custom_call.1} parent=5 // pred_check_branch
        %409 = sbr.rel (%p407) target = $region44
      $region43: #{tpu_custom_call.1} parent=5 // pred_region
        %s410 = ssub.s32 %s12, 2
        // Predicated region
        $region45: #{tpu_custom_call.1} parent=43 // pred_check
          %p411 = pneg %p115
        $region46: #{tpu_custom_call.1} parent=43 // pred_check_branch
          %413 = sbr.rel (%p411) target = $region48
        $region47: #{tpu_custom_call.1} parent=43 // pred_region
          %s414 = smul.u32 4, %s26
          %p415 = scmp.lt.s32.totalorder %s25, 1
          %s416 = scalar_select %p415, %s25, 1
          %p417 = scmp.lt.s32.totalorder %s414, 15
          %s418 = scalar_select %p417, %s414, 15
          %p419 = scmp.lt.s32.totalorder %s27, 0
          %s420 = scalar_select %p419, %s27, 0
          %s421 = sadd.s32 %s420, %s418
          %s422 = smul.addr %s416, 16
          %s423 = sadd.s32 %s421, %s422
          %s424 = smul.addr %s423, 8
          %s425 = scalar_lea.vmem %s2, %s424
        $region48: #{tpu_custom_call.1} parent=43 // pred_fallthru
          _
      $region44: #{tpu_custom_call.1} parent=5 // pred_fallthru
        _
    $region6: #{tpu_custom_call.1} parent=1 // loop_footer
      %s16 = sadd.s32 1, %s12
    $region7: #{tpu_custom_call.1} parent=1 // loop_footer_branch
      %11 = sbr.rel target = $region3
    $region8: #{tpu_custom_call.1} parent=1 // loop_exit
      _
    %426 = vsyncpa [#allocation3], 1
    %s427 = scalar_lea.sflag [#allocation3], 1
    %428 = vsyncpa %s427, 1
    %429 = vsyncpa [#allocation5], 1
    %s430 = scalar_lea.sflag [#allocation5], 1
    %431 = vsyncpa %s430, 1

</llo_original>
